<compile_context>
chip_gen: v5e
topology: v5e:2x2
jax: 0.10.0
libtpu: 0.0.40
codegen_flags: <defaults>
</compile_context>

<pallas_src>
import jax
import jax.numpy as jnp
from jax.experimental import pallas as pl
from jax.experimental.pallas import tpu as pltpu

_LANE = 128


def _cdiv(a, b):
    return -(-a // b)


def _round_up(n, m):
    return ((n + m - 1) // m) * m


def _make_mlp_kernel(num_layers):
    """Kernel for one batch tile, transposed (lane-dense) layout.

    refs = (x_ref, w1_ref, b1_ref, w2_ref, ..., wL_ref, out_ref)
      x_ref:   [in_channel, TB]            batch on lanes
      w1_ref:  [d1(+1), in_channel]        layer-1 weight (+ zero ones-gen row)
      b1_ref:  [d1(+1), 1]  f32            layer-1 bias (+ 1.0 ones-gen entry)
      wi_ref:  [d_i(+1), d_{i-1}+1]        bias column folded in; hidden layers
                                           also carry a [0...0, 1] ones-gen row
      out_ref: [out_channel, TB]           lane-dense store
    """

    def kernel(*refs):
        x_ref = refs[0]
        w1_ref, b1_ref = refs[1], refs[2]
        w_refs = refs[3:3 + (num_layers - 1)]
        out_ref = refs[-1]

        # Layer 1: [N, K] @ [K, TB] -> [N, TB]; bias added on the VPU in f32.
        # (Dropout = identity in eval mode.)
        h = jnp.dot(w1_ref[...], x_ref[...], preferred_element_type=jnp.float32)
        h = jnp.maximum(h + b1_ref[...], 0.0)   # last row becomes the ones row

        # Remaining layers: bias is a folded column, ones row self-propagates
        # (ReLU(0*h + 1*1) = 1), so the epilogue is just the ReLU max.
        for w_ref in w_refs:
            h = jnp.maximum(
                jnp.dot(w_ref[...], h.astype(w_ref.dtype),
                        preferred_element_type=jnp.float32),
                0.0)

        out_ref[...] = h.astype(out_ref.dtype)

    return kernel


def _pack_params(params, compute_dtype):
    """Augment PyTorch-layout params (W:[out,in], b:[out]) for bias folding."""
    num_layers = len(params)
    packed = []

    w1, b1 = params[0]
    d1, d0 = w1.shape
    if num_layers > 1:
        # Extra output row (all zeros) whose bias entry is 1.0 -> after ReLU it
        # is the constant-ones row consumed by the folded biases downstream.
        w1 = jnp.concatenate([w1, jnp.zeros((1, d0), w1.dtype)], axis=0)
        b1 = jnp.concatenate([b1, jnp.ones((1,), b1.dtype)], axis=0)
    packed.append(w1.astype(compute_dtype))
    packed.append(b1.reshape(-1, 1).astype(jnp.float32))

    for idx in range(1, num_layers):
        w, b = params[idx]
        n, k = w.shape
        wa = jnp.concatenate([w, b.reshape(-1, 1)], axis=1)        # [n, k+1]
        if idx < num_layers - 1:
            ones_row = jnp.concatenate(
                [jnp.zeros((1, k), w.dtype), jnp.ones((1, 1), w.dtype)], axis=1)
            wa = jnp.concatenate([wa, ones_row], axis=0)           # [n+1, k+1]
        packed.append(wa.astype(compute_dtype))

    return packed


def mlp_forward_t(xT, params, *, block_batch=65536, use_bf16=False,
                  out_dtype=jnp.float32, min_tiles_for_megacore=2):
    """Fast path: feature-major input/output (no wrapper transpose passes).

    xT:     [in_channel, batch]
    params: list of (W, b) in PyTorch layout, W: [out_dim, in_dim], b: [out_dim]
    Returns [out_channel, batch] in out_dtype.
    """
    in_channel, batch = xT.shape
    num_layers = len(params)
    out_channel = params[-1][0].shape[0]
    # bf16 streaming only pays if the producer already emits bf16 (the cast
    # below is otherwise an extra HBM pass); f32 is the right default on v5e.
    compute_dtype = jnp.bfloat16 if use_bf16 else jnp.float32

    # Adaptive tiling: minimal 128-lane-aligned padding, >=2 tiles when the
    # batch is large enough so v7x's two TensorCores both get work.
    num_tiles = max(1, _cdiv(batch, block_batch))
    if batch >= 2 * _LANE:
        num_tiles = max(num_tiles, min_tiles_for_megacore)
    tb = _round_up(_cdiv(batch, num_tiles), _LANE)
    num_tiles = _cdiv(batch, tb)
    padded = num_tiles * tb

    xT = xT.astype(compute_dtype)                  # no-op when dtype matches
    if padded != batch:
        # Only for ragged batches; <= num_tiles*128 zero columns, 4-row array.
        xT = jnp.pad(xT, ((0, 0), (0, padded - batch)))

    weight_args = _pack_params(params, compute_dtype)

    in_specs = [pl.BlockSpec((in_channel, tb), lambda i: (0, i))]
    # Weights/biases stay VMEM-resident across all grid steps (<~5 KiB total).
    in_specs += [pl.BlockSpec(a.shape, lambda i: (0, 0)) for a in weight_args]

    flops = 2 * padded * sum(int(w.size) for w, _ in params)
    bytes_accessed = (int(xT.size) * xT.dtype.itemsize
                      + padded * out_channel * jnp.dtype(out_dtype).itemsize
                      + sum(int(a.size) * a.dtype.itemsize for a in weight_args))

    outT = pl.pallas_call(
        _make_mlp_kernel(num_layers),
        out_shape=jax.ShapeDtypeStruct((out_channel, padded), out_dtype),
        grid=(num_tiles,),
        in_specs=in_specs,
        out_specs=pl.BlockSpec((out_channel, tb), lambda i: (0, i)),
        compiler_params=pltpu.CompilerParams(
            dimension_semantics=("parallel",),
            vmem_limit_bytes=48 * 1024 * 1024,
        ),
        cost_estimate=pl.CostEstimate(flops=flops, transcendentals=0,
                                      bytes_accessed=bytes_accessed),
    )(xT, *weight_args)

    return outT if padded == batch else outT[:, :batch]


def mlp_quantile_regressor_forward(x, params, **kwargs):
    """Compatibility wrapper for batch-major [batch, in_channel] inputs.

    NOTE: the transposes here cost an extra HBM pass over the input/output
    streams; prefer mlp_forward_t with feature-major data produced upstream.
    """
    return mlp_forward_t(x.T, params, **kwargs).T


def init_params(key, in_channel, out_channel, layers):
    """nn.Linear-style uniform(-1/sqrt(fan_in), 1/sqrt(fan_in)) init,
    stored in PyTorch orientation W: [out_dim, in_dim], b: [out_dim]."""
    dims = [in_channel] + list(layers) + [out_channel]
    params = []
    for i in range(len(dims) - 1):
        fan_in, fan_out = dims[i], dims[i + 1]
        key, kw, kb = jax.random.split(key, 3)
        bound = float(fan_in) ** -0.5
        w = jax.random.uniform(kw, (fan_out, fan_in), jnp.float32, -bound, bound)
        b = jax.random.uniform(kb, (fan_out,), jnp.float32, -bound, bound)
        params.append((w, b))
    return params


def reference_forward(x, params):
    """Pure-JAX f32 reference matching the PyTorch module in eval mode."""
    h = x
    for w, b in params:
        h = jnp.maximum(h @ w.T + b, 0.0)
    return h


if __name__ == "__main__":
    in_channel, out_channel = 4, 2
    layers = [16, 16, 16]

    key = jax.random.PRNGKey(0)
    key, kx = jax.random.split(key)
    params = init_params(key, in_channel, out_channel, layers)

    # 1) Small single-tile batch, feature-major fast path.
    batch = 8
    x = jax.random.normal(kx, (batch, in_channel), dtype=jnp.float32)
    ref = reference_forward(x, params)
    outT = jax.block_until_ready(mlp_forward_t(x.T, params))
    assert outT.shape == (out_channel, batch)
    assert jnp.allclose(outT.T, ref, atol=1e-4, rtol=1e-4), "f32 mismatch"

    # 2) Batch-major compatibility wrapper (module-native layout).
    out = jax.block_until_ready(mlp_quantile_regressor_forward(x, params))
    assert out.shape == (batch, out_channel)
    assert jnp.allclose(out, ref, atol=1e-4, rtol=1e-4), "compat-path mismatch"

    # 3) Ragged multi-tile batch: exercises adaptive tiling, >=2-tile grid
    #    (v7x megacore split), padding, and VMEM-resident weights.
    batch2 = 300
    key, kx2 = jax.random.split(key)
    x2 = jax.random.normal(kx2, (batch2, in_channel), dtype=jnp.float32)
    ref2 = reference_forward(x2, params)
    out2T = jax.block_until_ready(mlp_forward_t(x2.T, params, block_batch=128))
    assert out2T.shape == (out_channel, batch2)
    assert jnp.allclose(out2T.T, ref2, atol=1e-4, rtol=1e-4), "gridded mismatch"

    # 4) bf16 streaming option (only worthwhile when upstream already emits bf16).
    outbfT = jax.block_until_ready(mlp_forward_t(x2.T, params, use_bf16=True))
    assert outbfT.shape == (out_channel, batch2)
    assert jnp.allclose(outbfT.T, ref2, atol=5e-2, rtol=5e-2), "bf16 mismatch"

    # TODO(synk): training-mode Dropout (random masking with p=0.1) omitted;
    # forward matches PyTorch eval()-mode semantics.
    print("KERNEL_OK")
</pallas_src>

<mosaic_0001>
module attributes {stable_mosaic.version = 11 : i64} {
  func.func @kernel(%arg0: i32, %arg1: memref<4x128xf32, #tpu.memory_space<vmem>>, %arg2: memref<17x4xf32, #tpu.memory_space<vmem>>, %arg3: memref<17x1xf32, #tpu.memory_space<vmem>>, %arg4: memref<17x17xf32, #tpu.memory_space<vmem>>, %arg5: memref<17x17xf32, #tpu.memory_space<vmem>>, %arg6: memref<2x17xf32, #tpu.memory_space<vmem>>, %arg7: memref<2x128xf32, #tpu.memory_space<vmem>>) attributes {dimension_semantics = [#tpu.dimension_semantics<parallel>], iteration_bounds = array<i64: 1>, scalar_prefetch = 0 : i64, scratch_operands = 0 : i64, tpu.core_type = #tpu.core_type<tc>, window_params = [{transform_indices = @transform_0, window_bounds = array<i64: 4, 128>}, {pipeline_mode = #tpu.pipeline_mode<synchronous>, transform_indices = @transform_1, window_bounds = array<i64: 17, 4>}, {pipeline_mode = #tpu.pipeline_mode<synchronous>, transform_indices = @transform_2, window_bounds = array<i64: 17, 1>}, {pipeline_mode = #tpu.pipeline_mode<synchronous>, transform_indices = @transform_3, window_bounds = array<i64: 17, 17>}, {pipeline_mode = #tpu.pipeline_mode<synchronous>, transform_indices = @transform_4, window_bounds = array<i64: 17, 17>}, {pipeline_mode = #tpu.pipeline_mode<synchronous>, transform_indices = @transform_5, window_bounds = array<i64: 2, 17>}, {transform_indices = @transform_6, window_bounds = array<i64: 2, 128>}]} {
    %c0 = arith.constant 0 : index
    %c0_0 = arith.constant 0 : index
    %0 = vector.load %arg2[%c0, %c0_0] : memref<17x4xf32, #tpu.memory_space<vmem>>, vector<17x4xf32>
    %c0_1 = arith.constant 0 : index
    %c0_2 = arith.constant 0 : index
    %1 = vector.load %arg1[%c0_1, %c0_2] : memref<4x128xf32, #tpu.memory_space<vmem>>, vector<4x128xf32>
    %cst = arith.constant dense<0.000000e+00> : vector<17x128xf32>
    %2 = tpu.matmul %0, %1, %cst {dimension_numbers = #tpu.dot_dimension_numbers<[1], [0], [0], [1], [0, 0, 1, 1], [], []>} : vector<17x4xf32>, vector<4x128xf32>, vector<17x128xf32> -> vector<17x128xf32>
    %c0_3 = arith.constant 0 : index
    %c0_4 = arith.constant 0 : index
    %3 = vector.load %arg3[%c0_3, %c0_4] : memref<17x1xf32, #tpu.memory_space<vmem>>, vector<17x1xf32>
    %4 = vector.broadcast %3 : vector<17x1xf32> to vector<17x128xf32>
    %5 = arith.addf %2, %4 : vector<17x128xf32>
    %cst_5 = arith.constant 0.000000e+00 : f32
    %6 = vector.broadcast %cst_5 : f32 to vector<17x128xf32>
    %7 = arith.maximumf %5, %6 : vector<17x128xf32>
    %c0_6 = arith.constant 0 : index
    %c0_7 = arith.constant 0 : index
    %8 = vector.load %arg4[%c0_6, %c0_7] : memref<17x17xf32, #tpu.memory_space<vmem>>, vector<17x17xf32>
    %cst_8 = arith.constant dense<0.000000e+00> : vector<17x128xf32>
    %9 = tpu.matmul %8, %7, %cst_8 {dimension_numbers = #tpu.dot_dimension_numbers<[1], [0], [0], [1], [0, 0, 1, 1], [], []>} : vector<17x17xf32>, vector<17x128xf32>, vector<17x128xf32> -> vector<17x128xf32>
    %cst_9 = arith.constant 0.000000e+00 : f32
    %10 = vector.broadcast %cst_9 : f32 to vector<17x128xf32>
    %11 = arith.maximumf %9, %10 : vector<17x128xf32>
    %c0_10 = arith.constant 0 : index
    %c0_11 = arith.constant 0 : index
    %12 = vector.load %arg5[%c0_10, %c0_11] : memref<17x17xf32, #tpu.memory_space<vmem>>, vector<17x17xf32>
    %cst_12 = arith.constant dense<0.000000e+00> : vector<17x128xf32>
    %13 = tpu.matmul %12, %11, %cst_12 {dimension_numbers = #tpu.dot_dimension_numbers<[1], [0], [0], [1], [0, 0, 1, 1], [], []>} : vector<17x17xf32>, vector<17x128xf32>, vector<17x128xf32> -> vector<17x128xf32>
    %cst_13 = arith.constant 0.000000e+00 : f32
    %14 = vector.broadcast %cst_13 : f32 to vector<17x128xf32>
    %15 = arith.maximumf %13, %14 : vector<17x128xf32>
    %c0_14 = arith.constant 0 : index
    %c0_15 = arith.constant 0 : index
    %16 = vector.load %arg6[%c0_14, %c0_15] : memref<2x17xf32, #tpu.memory_space<vmem>>, vector<2x17xf32>
    %cst_16 = arith.constant dense<0.000000e+00> : vector<2x128xf32>
    %17 = tpu.matmul %16, %15, %cst_16 {dimension_numbers = #tpu.dot_dimension_numbers<[1], [0], [0], [1], [0, 0, 1, 1], [], []>} : vector<2x17xf32>, vector<17x128xf32>, vector<2x128xf32> -> vector<2x128xf32>
    %cst_17 = arith.constant 0.000000e+00 : f32
    %18 = vector.broadcast %cst_17 : f32 to vector<2x128xf32>
    %19 = arith.maximumf %17, %18 : vector<2x128xf32>
    %c0_18 = arith.constant 0 : index
    %c0_19 = arith.constant 0 : index
    %20 = vector.load %arg7[%c0_18, %c0_19] : memref<2x128xf32, #tpu.memory_space<vmem>>, vector<2x128xf32>
    tpu.vector_store %arg7[%c0_18, %c0_19], %19 {strides = array<i32>} : memref<2x128xf32, #tpu.memory_space<vmem>>, vector<2x128xf32>,
    return
  }
  func.func @transform_0(%arg0: i32) -> (i32, i32) {
    %c0_i32 = arith.constant 0 : i32
    %c0_i32_0 = arith.constant 0 : i32
    return %c0_i32, %arg0 : i32, i32
  }
  func.func @transform_1(%arg0: i32) -> (i32, i32) {
    %c0_i32 = arith.constant 0 : i32
    %c0_i32_0 = arith.constant 0 : i32
    %c0_i32_1 = arith.constant 0 : i32
    return %c0_i32, %c0_i32_0 : i32, i32
  }
  func.func @transform_2(%arg0: i32) -> (i32, i32) {
    %c0_i32 = arith.constant 0 : i32
    %c0_i32_0 = arith.constant 0 : i32
    %c0_i32_1 = arith.constant 0 : i32
    return %c0_i32, %c0_i32_0 : i32, i32
  }
  func.func @transform_3(%arg0: i32) -> (i32, i32) {
    %c0_i32 = arith.constant 0 : i32
    %c0_i32_0 = arith.constant 0 : i32
    %c0_i32_1 = arith.constant 0 : i32
    return %c0_i32, %c0_i32_0 : i32, i32
  }
  func.func @transform_4(%arg0: i32) -> (i32, i32) {
    %c0_i32 = arith.constant 0 : i32
    %c0_i32_0 = arith.constant 0 : i32
    %c0_i32_1 = arith.constant 0 : i32
    return %c0_i32, %c0_i32_0 : i32, i32
  }
  func.func @transform_5(%arg0: i32) -> (i32, i32) {
    %c0_i32 = arith.constant 0 : i32
    %c0_i32_0 = arith.constant 0 : i32
    %c0_i32_1 = arith.constant 0 : i32
    return %c0_i32, %c0_i32_0 : i32, i32
  }
  func.func @transform_6(%arg0: i32) -> (i32, i32) {
    %c0_i32 = arith.constant 0 : i32
    %c0_i32_0 = arith.constant 0 : i32
    return %c0_i32, %arg0 : i32, i32
  }
}

</mosaic_0001>

<llo_original>
// kernel: tpu_custom_call.1
$region0: #{tpu_custom_call.1}
  #allocation0 [shape = 'u32[]', space=smem, size = 0x4, offset = 0x4, fixed_abs, tag = 'smem constant byte address 0x4 - core index']
  #allocation1 [shape = 'u32[72,128]{1,0:T(1,128)}', space=vmem, size = 0x9000, scoped, tag = 'internal scratch']
  %s0 = inlined_call_operand.vmem [shape: f32[4,128], index: 0, kind: input, shape index: {}]
  %s1 = inlined_call_operand.vmem [shape: f32[17,4], index: 1, kind: input, shape index: {}]
  %s2 = inlined_call_operand.vmem [shape: f32[17,1], index: 2, kind: input, shape index: {}]
  %s3 = inlined_call_operand.vmem [shape: f32[17,17], index: 3, kind: input, shape index: {}]
  %s4 = inlined_call_operand.vmem [shape: f32[17,17], index: 4, kind: input, shape index: {}]
  %s5 = inlined_call_operand.vmem [shape: f32[2,17], index: 5, kind: input, shape index: {}]
  %s6 = inlined_call_operand.hbm [shape: f32[2,128], index: 6, kind: output, shape index: {}]
  %s7 = sld [smem:[#allocation0]]
  $region34: #{tpu_custom_call.1} parent=0
    _
  %s9 = ssub.s32 1, %s7
  %s10 = scalar_select 0, %s9, %s7
  $region1: #{tpu_custom_call.1} parent=0
    #allocation2 [shape = 'u8[1024]{0}', space=vmem, size = 0x400, scoped, tag = 'output window, operand 0, single buffered']
    #allocation3 [shape = 's32[1]{0}', space=sflag, size = 0x4, scoped, tag = 'scoped memory for tpu_custom_call.1']
    %11 = vsyncpa [#allocation3], 0
    // Predicated region
    $region2: #{tpu_custom_call.1} parent=1 // pred_check
      _
    $region3: #{tpu_custom_call.1} parent=1 // pred_check_branch
      %13 = sbr.rel (0) target = $region5
    $region4: #{tpu_custom_call.1} parent=1 // pred_region
      _
    $region5: #{tpu_custom_call.1} parent=1 // pred_fallthru
      _
    // Predicated region
    $region6: #{tpu_custom_call.1} parent=1 // pred_check
      _
    $region7: #{tpu_custom_call.1} parent=1 // pred_check_branch
      %15 = sbr.rel (0) target = $region9
    $region8: #{tpu_custom_call.1} parent=1 // pred_region
      _
    $region9: #{tpu_custom_call.1} parent=1 // pred_fallthru
      _
    // Predicated region
    $region10: #{tpu_custom_call.1} parent=1 // pred_check
      _
    $region11: #{tpu_custom_call.1} parent=1 // pred_check_branch
      %17 = sbr.rel (0) target = $region13
    $region12: #{tpu_custom_call.1} parent=1 // pred_region
      _
    $region13: #{tpu_custom_call.1} parent=1 // pred_fallthru
      _
    // Predicated region
    $region14: #{tpu_custom_call.1} parent=1 // pred_check
      _
    $region15: #{tpu_custom_call.1} parent=1 // pred_check_branch
      %19 = sbr.rel (0) target = $region17
    $region16: #{tpu_custom_call.1} parent=1 // pred_region
      _
    $region17: #{tpu_custom_call.1} parent=1 // pred_fallthru
      _
    // Predicated region
    $region18: #{tpu_custom_call.1} parent=1 // pred_check
      _
    $region19: #{tpu_custom_call.1} parent=1 // pred_check_branch
      %21 = sbr.rel (0) target = $region21
    $region20: #{tpu_custom_call.1} parent=1 // pred_region
      _
    $region21: #{tpu_custom_call.1} parent=1 // pred_fallthru
      _
    // Predicated region
    $region22: #{tpu_custom_call.1} parent=1 // pred_check
      _
    $region23: #{tpu_custom_call.1} parent=1 // pred_check_branch
      %23 = sbr.rel (0) target = $region25
    $region24: #{tpu_custom_call.1} parent=1 // pred_region
      _
    $region25: #{tpu_custom_call.1} parent=1 // pred_fallthru
      _
    %v24 = vld [vmem:[%s1] sm:$0xff]
    %v25 = vld [vmem:[%s1 + $0x8] sm:$0xff]
    %v26 = vld [vmem:[%s1 + $0x10] sm:$0x1]
    %v27 = vld [vmem:[%s0] sm:$0xf]
    %v28 = vld [vmem:[%s2] sm:$0xff]
    %v29 = vld [vmem:[%s2 + $0x8] sm:$0xff]
    %v30 = vld [vmem:[%s2 + $0x10] sm:$0x1]
    %32 = vset.pattern.permute.xlu0 0
    %33 = vperm.xlu0 %32, %v28
    %v34 = vpop.permute.xlu0 %33
    %37 = vset.pattern.permute.xlu0 0
    %38 = vperm.xlu0 %37, %v29
    %v39 = vpop.permute.xlu0 %38
    %42 = vset.pattern.permute.xlu0 0
    %43 = vperm.xlu0 %42, %v30
    %v44 = vpop.permute.xlu0 %43
    %vm46 = vcmask 31744
    %v48 = vsel %vm46, %v24, 0
    %v51 = vsel %vm46, %v25, 0
    %v54 = vsel %vm46, %v26, 0
    %vm56 = vcmask 1043456
    %v58 = vsel %vm56, %v27, 0
    %60 = vmatpush.msra.mxu0 0.0
    %61 = vmatpush.msra.mxu0 0.0
    %62 = vmatpush.msra.mxu0 0.0
    %63 = vmatpush.msra.mxu0 0.0
    %64 = vmatpush.msra.mxu0 0.0
    %65 = vmatpush.msra.mxu0 0.0
    %66 = vmatpush.msra.mxu0 0.0
    %67 = vmatpush.msra.mxu0 0.0
    %68 = vmatpush.msra.mxu0 0.0
    %69 = vmatpush.msra.mxu0 0.0
    %70 = vmatpush.msra.mxu0 0.0
    %71 = vmatpush.msra.mxu0 0.0
    %72 = vmatpush.msra.mxu0 0.0
    %73 = vmatpush.msra.mxu0 0.0
    %74 = vmatpush.msra.mxu0 0.0
    %75 = vmatpush.msra.mxu0 %v58
    %76 = vmatmul.f32.gmra.mxu0 %v48
    %v77 = vpop.f32.mrf.mxu0
    %v78 = vadd.f32 %v34, %v77
    %79 = vmatmul.f32.gmra.mxu0 %v51
    %v80 = vpop.f32.mrf.mxu0
    %v81 = vadd.f32 %v39, %v80
    %82 = vmatmul.f32.gmra.mxu0 %v54
    %v83 = vpop.f32.mrf.mxu0
    %v84 = vadd.f32 %v44, %v83
    %85 = vdwg.mxu0
    %v86 = vmax.f32 %v78, 0.0
    %v87 = vmax.f32 %v81, 0.0
    %v88 = vmax.f32 %v84, 0.0
    %v89 = vld [vmem:[%s3] sm:$0xff]
    %v90 = vld [vmem:[%s3 + $0x8] sm:$0xff]
    %v91 = vld [vmem:[%s3 + $0x10] sm:$0x1]
    %vm92 = vcmask 138240
    %v94 = vsel %vm92, %v89, 0
    %v97 = vsel %vm92, %v90, 0
    %v100 = vsel %vm92, %v91, 0
    %vm102 = vcmask 1040384
    %v104 = vsel %vm102, %v88, 0
    %106 = vmatpush.msra.mxu0 0.0
    %107 = vmatpush.msra.mxu0 0.0
    %108 = vmatpush.msra.mxu0 0.0
    %109 = vmatpush.msra.mxu0 0.0
    %110 = vmatpush.msra.mxu0 0.0
    %111 = vmatpush.msra.mxu0 0.0
    %112 = vmatpush.msra.mxu0 0.0
    %113 = vmatpush.msra.mxu0 0.0
    %114 = vmatpush.msra.mxu0 0.0
    %115 = vmatpush.msra.mxu0 0.0
    %116 = vmatpush.msra.mxu0 0.0
    %117 = vmatpush.msra.mxu0 0.0
    %118 = vmatpush.msra.mxu0 0.0
    %119 = vmatpush.msra.mxu0 %v104
    %120 = vmatpush.msra.mxu0 %v87
    %121 = vmatpush.msra.mxu0 %v86
    %122 = vmatmul.f32.gmra.mxu0 %v94
    %v123 = vpop.f32.mrf.mxu0
    %v124 = vadd.f32 0.0, %v123
    %125 = vmatmul.f32.gmra.mxu0 %v97
    %v126 = vpop.f32.mrf.mxu0
    %v127 = vadd.f32 0.0, %v126
    %128 = vmatmul.f32.gmra.mxu0 %v100
    %v129 = vpop.f32.mrf.mxu0
    %v130 = vadd.f32 0.0, %v129
    %131 = vdwg.mxu0
    %v132 = vmax.f32 %v124, 0.0
    %v133 = vmax.f32 %v127, 0.0
    %v134 = vmax.f32 %v130, 0.0
    %v135 = vld [vmem:[%s4] sm:$0xff]
    %v136 = vld [vmem:[%s4 + $0x8] sm:$0xff]
    %v137 = vld [vmem:[%s4 + $0x10] sm:$0x1]
    %v139 = vsel %vm92, %v135, 0
    %v142 = vsel %vm92, %v136, 0
    %v145 = vsel %vm92, %v137, 0
    %v148 = vsel %vm102, %v134, 0
    %150 = vmatpush.msra.mxu0 0.0
    %151 = vmatpush.msra.mxu0 0.0
    %152 = vmatpush.msra.mxu0 0.0
    %153 = vmatpush.msra.mxu0 0.0
    %154 = vmatpush.msra.mxu0 0.0
    %155 = vmatpush.msra.mxu0 0.0
    %156 = vmatpush.msra.mxu0 0.0
    %157 = vmatpush.msra.mxu0 0.0
    %158 = vmatpush.msra.mxu0 0.0
    %159 = vmatpush.msra.mxu0 0.0
    %160 = vmatpush.msra.mxu0 0.0
    %161 = vmatpush.msra.mxu0 0.0
    %162 = vmatpush.msra.mxu0 0.0
    %163 = vmatpush.msra.mxu0 %v148
    %164 = vmatpush.msra.mxu0 %v133
    %165 = vmatpush.msra.mxu0 %v132
    %166 = vmatmul.f32.gmra.mxu0 %v139
    %v167 = vpop.f32.mrf.mxu0
    %v168 = vadd.f32 0.0, %v167
    %169 = vmatmul.f32.gmra.mxu0 %v142
    %v170 = vpop.f32.mrf.mxu0
    %v171 = vadd.f32 0.0, %v170
    %172 = vmatmul.f32.gmra.mxu0 %v145
    %v173 = vpop.f32.mrf.mxu0
    %v174 = vadd.f32 0.0, %v173
    %175 = vdwg.mxu0
    %v176 = vmax.f32 %v168, 0.0
    %v177 = vmax.f32 %v171, 0.0
    %v178 = vmax.f32 %v174, 0.0
    %v179 = vld [vmem:[%s5] sm:$0x3]
    %v181 = vsel %vm92, %v179, 0
    %v184 = vsel %vm102, %v178, 0
    %186 = vmatpush.msra.mxu0 0.0
    %187 = vmatpush.msra.mxu0 0.0
    %188 = vmatpush.msra.mxu0 0.0
    %189 = vmatpush.msra.mxu0 0.0
    %190 = vmatpush.msra.mxu0 0.0
    %191 = vmatpush.msra.mxu0 0.0
    %192 = vmatpush.msra.mxu0 0.0
    %193 = vmatpush.msra.mxu0 0.0
    %194 = vmatpush.msra.mxu0 0.0
    %195 = vmatpush.msra.mxu0 0.0
    %196 = vmatpush.msra.mxu0 0.0
    %197 = vmatpush.msra.mxu0 0.0
    %198 = vmatpush.msra.mxu0 0.0
    %199 = vmatpush.msra.mxu0 %v184
    %200 = vmatpush.msra.mxu0 %v177
    %201 = vmatpush.msra.mxu0 %v176
    %202 = vmatmul.f32.gmra.mxu0 %v181
    %v203 = vpop.f32.mrf.mxu0
    %v204 = vadd.f32 0.0, %v203
    %205 = vdwg.mxu0
    %v206 = vmax.f32 %v204, 0.0
    %207 = vst [vmem:[#allocation2] sm:$0x3] %v206
    // Predicated region
    $region26: #{tpu_custom_call.1} parent=1 // pred_check
      _
    $region27: #{tpu_custom_call.1} parent=1 // pred_check_branch
      %209 = sbr.rel (0) target = $region29
    $region28: #{tpu_custom_call.1} parent=1 // pred_region
      %211 = vsyncadd [#allocation3], 0
      %s213 = sshll.u32 [#allocation2], 4
      %s214 = int_to_ptr.vmem [resolvable:$true] %s213
      %s215 = sshll.u32 %s6, 4
      %s216 = int_to_ptr.hbm [resolvable:$true] %s215
      %218 = dma.vmem_to_hbm [thread:$0]  %s214, 32, %s216, [#allocation3]
    $region29: #{tpu_custom_call.1} parent=1 // pred_fallthru
      _
    // Predicated region
    $region30: #{tpu_custom_call.1} parent=1 // pred_check
      _
    $region31: #{tpu_custom_call.1} parent=1 // pred_check_branch
      %220 = sbr.rel (0) target = $region33
    $region32: #{tpu_custom_call.1} parent=1 // pred_region
      %222 = dma.done [#allocation3], 32
    $region33: #{tpu_custom_call.1} parent=1 // pred_fallthru
      _
    %223 = vsyncpa [#allocation3], 1

</llo_original>
